<compile_context>
chip_gen: v7x
topology: tpu7x:2x2x1
jax: 0.10.0
libtpu: 0.0.40
codegen_flags: <defaults>
</compile_context>

<pallas_src>
import functools

import jax
import jax.numpy as jnp
import numpy as np
from jax.experimental import pallas as pl
from jax.experimental.pallas import tpu as pltpu


def _round_up(x, m):
    return (x + m - 1) // m * m


def gated_cnn_classifier_kernel(x_ref, w_ref, cw_ref, cb_ref, o_ref, *,
                                K, H, chunk, n_chunks, out_len):
    """One batch tile: gated conv (K taps), streaming max-pool over S, classifier.

    x_ref : (bt, S_halo, H)    bf16  zero-padded activations (left halo + right pad)
    w_ref : (K, H, 2H)         bf16  stacked [conv | gate] weights per tap
    cw_ref: (H, OUT_PAD)       bf16  classifier weight, lane-padded
    cb_ref: (1, OUT_PAD)       f32   classifier bias, lane-padded
    o_ref : (1, bt, OUT_PAD)   f32   logits (lane-dense slab)
    """
    bt = x_ref.shape[0]
    M = bt * chunk
    out_len_total = n_chunks * chunk

    def chunk_step(c, running_max):
        if isinstance(c, int):                      # statically unrolled path
            s0 = c * chunk
        else:                                       # fori_loop path (long S)
            s0 = pl.multiple_of(c * chunk, chunk)

        # Tap 0 initializes the accumulator (no zero-fill + add pass).
        lhs = x_ref[:, pl.ds(s0, chunk), :].reshape(M, H)
        acc = jnp.dot(lhs, w_ref[0], preferred_element_type=jnp.float32)
        for t in range(1, K):                       # static unroll over taps
            lhs = x_ref[:, pl.ds(s0 + t, chunk), :].reshape(M, H)
            acc = acc + jnp.dot(lhs, w_ref[t], preferred_element_type=jnp.float32)

        a = acc[:, :H]                               # lane-aligned split (H % 128 == 0)
        g = jax.nn.sigmoid(acc[:, H:])               # EUP
        gated = (a * g).reshape(bt, chunk, H)        # f32, O(chunk) live

        # Mask conv positions past the true output length (only if S was padded
        # up to a chunk multiple, and only on chunks that actually overhang).
        needs_mask = out_len_total != out_len
        if needs_mask and isinstance(c, int):
            needs_mask = (c + 1) * chunk > out_len
        if needs_mask:
            pos = s0 + jax.lax.broadcasted_iota(jnp.int32, (1, chunk, 1), 1)
            gated = jnp.where(pos < out_len, gated, -jnp.inf)

        return jnp.maximum(running_max, jnp.max(gated, axis=1))

    running = jnp.full((bt, H), -jnp.inf, jnp.float32)
    if n_chunks <= 4:
        for c in range(n_chunks):                    # short S: fully static
            running = chunk_step(c, running)
    else:
        running = jax.lax.fori_loop(0, n_chunks, chunk_step, running)

    logits = jnp.dot(running.astype(jnp.bfloat16), cw_ref[...],
                     preferred_element_type=jnp.float32) + cb_ref[...]
    o_ref[0, :, :] = logits


def torch_model_forward(tokens, params, *, kernel_size, class_num,
                        b_tile=8, chunk=128):
    """TorchModel(gated_cnn, max pooling) forward -> logits (B, class_num)."""
    emb = params["embedding"]        # (V+1, H0) f32, row 0 is zero (padding_idx=0)
    wa = params["conv_w"]            # (H_out, H_in, K)  PyTorch Conv1d layout
    wg = params["gate_w"]            # (H_out, H_in, K)
    cw = params["cls_w"]             # (class_num, H0)   PyTorch Linear layout
    cb = params["cls_b"]             # (class_num,)

    B, S = tokens.shape
    H0 = emb.shape[1]
    K = kernel_size
    pad = (K - 1) // 2
    out_len = S + 2 * pad - K + 1    # matches PyTorch Conv1d output length
    assert out_len >= 1

    # --- enforce layout assumptions: H padded to a multiple of 128 ---------------
    H = _round_up(H0, 128)
    if H != H0:
        emb = jnp.pad(emb, ((0, 0), (0, H - H0)))
        wa = jnp.pad(wa, ((0, H - H0), (0, H - H0), (0, 0)))
        wg = jnp.pad(wg, ((0, H - H0), (0, H - H0), (0, 0)))
        cw = jnp.pad(cw, ((0, 0), (0, H - H0)))

    # --- sequence chunking: bounds f32 temporaries to O(chunk); multiple of 16 ---
    chunk_sz = min(_round_up(chunk, 16), _round_up(out_len, 16))
    n_chunks = -(-out_len // chunk_sz)
    out_len_total = n_chunks * chunk_sz
    S_halo = out_len_total + K - 1
    right_pad = S_halo - pad - S            # >= pad, so the zero halo is preserved

    # --- batch tiling: several grid steps so DMA/compute pipeline + megacore ----
    bt = max(1, min(b_tile, max(4, -(-B // 8))))
    B_pad = _round_up(B, bt)
    n_tiles = B_pad // bt

    # 1) Embedding lookup stays in plain XLA; cast the table to bf16 first so the
    #    gathered / padded HBM intermediate carries half the traffic.
    x = jnp.take(emb.astype(jnp.bfloat16), tokens, axis=0)            # (B, S, H)
    x = jnp.pad(x, ((0, B_pad - B), (pad, right_pad), (0, 0)))        # (B_pad, S_halo, H)

    # 2) Fuse conv + gate weights along output channels: (K, H, 2H), bf16.
    w_stacked = jnp.stack(
        [jnp.concatenate([wa[:, :, t].T, wg[:, :, t].T], axis=1) for t in range(K)],
        axis=0).astype(jnp.bfloat16)

    # 3) Lane-dense classifier: pad the output dim to a multiple of 128.
    out_pad = _round_up(max(class_num, 1), 128)
    cw_p = jnp.zeros((H, out_pad), jnp.bfloat16).at[:, :class_num].set(
        cw.T.astype(jnp.bfloat16))
    cb_p = jnp.zeros((1, out_pad), jnp.float32).at[:, :class_num].set(
        cb.astype(jnp.float32))

    kernel = functools.partial(gated_cnn_classifier_kernel, K=K, H=H,
                               chunk=chunk_sz, n_chunks=n_chunks, out_len=out_len)

    # 4) Explicit VMEM budget (double-buffered x tile + resident weights + per-chunk
    #    f32 temporaries), capped at 64 MiB so it is valid on v7x too.
    M = bt * chunk_sz
    est = (2 * bt * S_halo * H * 2            # x tile, 2 pipeline buffers (bf16)
           + K * H * 2 * H * 2                # stacked conv/gate weights (bf16)
           + H * out_pad * 2 + out_pad * 4    # classifier weights + bias
           + 2 * bt * out_pad * 4             # output slab, double-buffered
           + 3 * M * 2 * H * 4                # acc / sigmoid / gated temporaries (f32)
           + K * M * H * 2)                   # tap slices in flight (bf16)
    vmem_limit = int(min(64 * 1024 * 1024, max(32 * 1024 * 1024, 2 * est)))

    out = pl.pallas_call(
        kernel,
        out_shape=jax.ShapeDtypeStruct((n_tiles, bt, out_pad), jnp.float32),
        grid=(n_tiles,),
        in_specs=[
            # activations: one haloed tile per batch block (taps sliced from the ref)
            pl.BlockSpec((bt, S_halo, H), lambda b: (b, 0, 0)),
            # weights: constant block index -> VMEM-resident across the grid
            pl.BlockSpec((K, H, 2 * H), lambda b: (0, 0, 0)),
            pl.BlockSpec((H, out_pad), lambda b: (0, 0)),
            pl.BlockSpec((1, out_pad), lambda b: (0, 0)),
        ],
        out_specs=pl.BlockSpec((1, bt, out_pad), lambda b: (b, 0, 0)),
        compiler_params=pltpu.CompilerParams(
            dimension_semantics=("parallel",),
            vmem_limit_bytes=vmem_limit),
    )(x, w_stacked, cw_p, cb_p)

    return out.reshape(B_pad, out_pad)[:B, :class_num]


if __name__ == "__main__":
    # Small, deterministic example consistent with the module.
    B, S, H, V, K, C = 16, 32, 128, 100, 3, 5

    key = jax.random.PRNGKey(0)
    k1, k2, k3, k4, k5, k6 = jax.random.split(key, 6)

    tokens = jax.random.randint(k1, (B, S), 0, V + 1)
    emb = jax.random.normal(k2, (V + 1, H), jnp.float32) * 0.5
    emb = emb.at[0].set(0.0)                     # padding_idx=0 -> zero row
    scale = 1.0 / np.sqrt(H * K)
    wa = jax.random.normal(k3, (H, H, K), jnp.float32) * scale
    wg = jax.random.normal(k4, (H, H, K), jnp.float32) * scale
    cw = jax.random.normal(k5, (C, H), jnp.float32) * (1.0 / np.sqrt(H))
    cb = jax.random.normal(k6, (C,), jnp.float32) * 0.01

    params = dict(embedding=emb, conv_w=wa, gate_w=wg, cls_w=cw, cls_b=cb)

    fwd = jax.jit(functools.partial(torch_model_forward, kernel_size=K, class_num=C))
    logits = jax.block_until_ready(fwd(tokens, params))
    assert logits.shape == (B, C)

    # Pure-JAX f32 reference for a sanity check (kernel uses bf16 matmuls).
    def reference(tok):
        x = emb[tok]                                             # (B,S,H)
        p = (K - 1) // 2
        xp = jnp.pad(x, ((0, 0), (p, p), (0, 0)))
        L = S + 2 * p - K + 1
        a = sum(jnp.einsum("bsh,oh->bso", xp[:, t:t + L, :], wa[:, :, t]) for t in range(K))
        g = sum(jnp.einsum("bsh,oh->bso", xp[:, t:t + L, :], wg[:, :, t]) for t in range(K))
        gated = a * jax.nn.sigmoid(g)
        pooled = gated.max(axis=1)
        return pooled @ cw.T + cb

    ref = reference(tokens)
    max_err = float(jnp.max(jnp.abs(logits - ref)))
    assert max_err < 0.2, f"kernel/reference mismatch, max abs err = {max_err}"

    print("KERNEL_OK")
</pallas_src>

<mosaic_0001>
module attributes {stable_mosaic.version = 11 : i64} {
  func.func @gated_cnn_classifier_kernel(%arg0: i32, %arg1: memref<4x34x128xbf16, #tpu.memory_space<vmem>>, %arg2: memref<3x128x256xbf16, #tpu.memory_space<vmem>>, %arg3: memref<128x128xbf16, #tpu.memory_space<vmem>>, %arg4: memref<1x128xf32, #tpu.memory_space<vmem>>, %arg5: memref<1x4x128xf32, #tpu.memory_space<vmem>>) attributes {dimension_semantics = [#tpu.dimension_semantics<parallel>], iteration_bounds = array<i64: 4>, scalar_prefetch = 0 : i64, scratch_operands = 0 : i64, tpu.core_type = #tpu.core_type<tc>, window_params = [{transform_indices = @transform_0, window_bounds = array<i64: 4, 34, 128>}, {pipeline_mode = #tpu.pipeline_mode<synchronous>, transform_indices = @transform_1, window_bounds = array<i64: 3, 128, 256>}, {pipeline_mode = #tpu.pipeline_mode<synchronous>, transform_indices = @transform_2, window_bounds = array<i64: 128, 128>}, {pipeline_mode = #tpu.pipeline_mode<synchronous>, transform_indices = @transform_3, window_bounds = array<i64: 1, 128>}, {transform_indices = @transform_4, window_bounds = array<i64: 1, 4, 128>}]} {
    %cst = arith.constant 0xFF800000 : f32
    %0 = vector.broadcast %cst : f32 to vector<4x128xf32>
    %c0 = arith.constant 0 : index
    %c0_0 = arith.constant 0 : index
    %c0_1 = arith.constant 0 : index
    %1 = vector.load %arg1[%c0, %c0_0, %c0_1] : memref<4x34x128xbf16, #tpu.memory_space<vmem>>, vector<4x32x128xbf16>
    %2 = vector.shape_cast %1 : vector<4x32x128xbf16> to vector<128x128xbf16>
    %c0_2 = arith.constant 0 : index
    %c0_3 = arith.constant 0 : index
    %c0_4 = arith.constant 0 : index
    %3 = vector.load %arg2[%c0_2, %c0_3, %c0_4] : memref<3x128x256xbf16, #tpu.memory_space<vmem>>, vector<1x128x256xbf16>
    %4 = vector.shape_cast %3 : vector<1x128x256xbf16> to vector<128x256xbf16>
    %cst_5 = arith.constant dense<0.000000e+00> : vector<128x256xf32>
    %5 = tpu.matmul %2, %4, %cst_5 {dimension_numbers = #tpu.dot_dimension_numbers<[1], [0], [0], [1], [0, 0, 1, 1], [], []>} : vector<128x128xbf16>, vector<128x256xbf16>, vector<128x256xf32> -> vector<128x256xf32>
    %c0_6 = arith.constant 0 : index
    %c1 = arith.constant 1 : index
    %c0_7 = arith.constant 0 : index
    %6 = vector.load %arg1[%c0_6, %c1, %c0_7] : memref<4x34x128xbf16, #tpu.memory_space<vmem>>, vector<4x32x128xbf16>
    %7 = vector.shape_cast %6 : vector<4x32x128xbf16> to vector<128x128xbf16>
    %c1_8 = arith.constant 1 : index
    %c0_9 = arith.constant 0 : index
    %c0_10 = arith.constant 0 : index
    %8 = vector.load %arg2[%c1_8, %c0_9, %c0_10] : memref<3x128x256xbf16, #tpu.memory_space<vmem>>, vector<1x128x256xbf16>
    %9 = vector.shape_cast %8 : vector<1x128x256xbf16> to vector<128x256xbf16>
    %cst_11 = arith.constant dense<0.000000e+00> : vector<128x256xf32>
    %10 = tpu.matmul %7, %9, %cst_11 {dimension_numbers = #tpu.dot_dimension_numbers<[1], [0], [0], [1], [0, 0, 1, 1], [], []>} : vector<128x128xbf16>, vector<128x256xbf16>, vector<128x256xf32> -> vector<128x256xf32>
    %11 = arith.addf %5, %10 : vector<128x256xf32>
    %c0_12 = arith.constant 0 : index
    %c2 = arith.constant 2 : index
    %c0_13 = arith.constant 0 : index
    %12 = vector.load %arg1[%c0_12, %c2, %c0_13] : memref<4x34x128xbf16, #tpu.memory_space<vmem>>, vector<4x32x128xbf16>
    %13 = vector.shape_cast %12 : vector<4x32x128xbf16> to vector<128x128xbf16>
    %c2_14 = arith.constant 2 : index
    %c0_15 = arith.constant 0 : index
    %c0_16 = arith.constant 0 : index
    %14 = vector.load %arg2[%c2_14, %c0_15, %c0_16] : memref<3x128x256xbf16, #tpu.memory_space<vmem>>, vector<1x128x256xbf16>
    %15 = vector.shape_cast %14 : vector<1x128x256xbf16> to vector<128x256xbf16>
    %cst_17 = arith.constant dense<0.000000e+00> : vector<128x256xf32>
    %16 = tpu.matmul %13, %15, %cst_17 {dimension_numbers = #tpu.dot_dimension_numbers<[1], [0], [0], [1], [0, 0, 1, 1], [], []>} : vector<128x128xbf16>, vector<128x256xbf16>, vector<128x256xf32> -> vector<128x256xf32>
    %17 = arith.addf %11, %16 : vector<128x256xf32>
    %18 = vector.extract_strided_slice %17 {offsets = [0, 0], sizes = [128, 128], strides = [1, 1]} : vector<128x256xf32> to vector<128x128xf32>
    %19 = vector.extract_strided_slice %17 {offsets = [0, 128], sizes = [128, 128], strides = [1, 1]} : vector<128x256xf32> to vector<128x128xf32>
    %20 = arith.negf %19 : vector<128x128xf32>
    %21 = math.exp %20 : vector<128x128xf32>
    %cst_18 = arith.constant 1.000000e+00 : f32
    %22 = vector.broadcast %cst_18 : f32 to vector<128x128xf32>
    %23 = arith.addf %22, %21 : vector<128x128xf32>
    %24 = arith.divf %22, %23 : vector<128x128xf32>
    %25 = arith.mulf %18, %24 : vector<128x128xf32>
    %26 = vector.shape_cast %25 : vector<128x128xf32> to vector<4x32x128xf32>
    %cst_19 = arith.constant dense<0xFF800000> : vector<4x128xf32>
    %27 = vector.multi_reduction <maximumf>, %26, %cst_19 [1] : vector<4x32x128xf32> to vector<4x128xf32>
    %28 = arith.maximumf %0, %27 : vector<4x128xf32>
    %29 = arith.truncf %28 : vector<4x128xf32> to vector<4x128xbf16>
    %c0_20 = arith.constant 0 : index
    %c0_21 = arith.constant 0 : index
    %30 = vector.load %arg3[%c0_20, %c0_21] : memref<128x128xbf16, #tpu.memory_space<vmem>>, vector<128x128xbf16>
    %cst_22 = arith.constant dense<0.000000e+00> : vector<4x128xf32>
    %31 = tpu.matmul %29, %30, %cst_22 {dimension_numbers = #tpu.dot_dimension_numbers<[1], [0], [0], [1], [0, 0, 1, 1], [], []>} : vector<4x128xbf16>, vector<128x128xbf16>, vector<4x128xf32> -> vector<4x128xf32>
    %c0_23 = arith.constant 0 : index
    %c0_24 = arith.constant 0 : index
    %32 = vector.load %arg4[%c0_23, %c0_24] : memref<1x128xf32, #tpu.memory_space<vmem>>, vector<1x128xf32>
    %33 = vector.broadcast %32 : vector<1x128xf32> to vector<4x128xf32>
    %34 = arith.addf %31, %33 : vector<4x128xf32>
    %c0_25 = arith.constant 0 : index
    %c0_26 = arith.constant 0 : index
    %c0_27 = arith.constant 0 : index
    %35 = vector.load %arg5[%c0_25, %c0_26, %c0_27] : memref<1x4x128xf32, #tpu.memory_space<vmem>>, vector<1x4x128xf32>
    %36 = vector.shape_cast %35 : vector<1x4x128xf32> to vector<4x128xf32>
    %37 = vector.shape_cast %34 : vector<4x128xf32> to vector<1x4x128xf32>
    tpu.vector_store %arg5[%c0_25, %c0_26, %c0_27], %37 {strides = array<i32>} : memref<1x4x128xf32, #tpu.memory_space<vmem>>, vector<1x4x128xf32>,
    return
  }
  func.func @transform_0(%arg0: i32) -> (i32, i32, i32) {
    %c0_i32 = arith.constant 0 : i32
    %c0_i32_0 = arith.constant 0 : i32
    %c0_i32_1 = arith.constant 0 : i32
    return %arg0, %c0_i32, %c0_i32_0 : i32, i32, i32
  }
  func.func @transform_1(%arg0: i32) -> (i32, i32, i32) {
    %c0_i32 = arith.constant 0 : i32
    %c0_i32_0 = arith.constant 0 : i32
    %c0_i32_1 = arith.constant 0 : i32
    %c0_i32_2 = arith.constant 0 : i32
    return %c0_i32, %c0_i32_0, %c0_i32_1 : i32, i32, i32
  }
  func.func @transform_2(%arg0: i32) -> (i32, i32) {
    %c0_i32 = arith.constant 0 : i32
    %c0_i32_0 = arith.constant 0 : i32
    %c0_i32_1 = arith.constant 0 : i32
    return %c0_i32, %c0_i32_0 : i32, i32
  }
  func.func @transform_3(%arg0: i32) -> (i32, i32) {
    %c0_i32 = arith.constant 0 : i32
    %c0_i32_0 = arith.constant 0 : i32
    %c0_i32_1 = arith.constant 0 : i32
    return %c0_i32, %c0_i32_0 : i32, i32
  }
  func.func @transform_4(%arg0: i32) -> (i32, i32, i32) {
    %c0_i32 = arith.constant 0 : i32
    %c0_i32_0 = arith.constant 0 : i32
    %c0_i32_1 = arith.constant 0 : i32
    return %arg0, %c0_i32, %c0_i32_0 : i32, i32, i32
  }
}

</mosaic_0001>

<llo_original>
// kernel: torch_model_forward.1
$region0: #{torch_model_forward.1}
  #allocation0 [shape = 'u32[]', space=smem, size = 0x4, offset = 0x4, fixed_abs, tag = 'smem constant byte address 0x4 - core index']
  #allocation1 [shape = 'u32[144,128]{1,0:T(1,128)}', space=vmem, size = 0x12000, scoped, tag = 'internal scratch']
  %s0 = inlined_call_operand.vmem [shape: bf16[16,34,128], index: 0, kind: input, shape index: {}]
  %s1 = inlined_call_operand.vmem [shape: bf16[3,128,256], index: 1, kind: input, shape index: {}]
  %s2 = inlined_call_operand.vmem [shape: bf16[128,128], index: 2, kind: input, shape index: {}]
  %s3 = inlined_call_operand.vmem [shape: f32[1,128], index: 3, kind: input, shape index: {}]
  %s4 = inlined_call_operand.vmem [shape: f32[4,4,128], index: 4, kind: output, shape index: {}]
  %s5 = sld [smem:[#allocation0]]
  $region49: #{torch_model_forward.1} parent=0
    _
  %s7 = ssub.s32 1, %s5
  %s8 = scalar_select 0, %s7, %s5
  loop: start=0, step=1, limit=6
  $region2: #{torch_model_forward.1} parent=0 // loop_pre_header
    _
  $region3: #{torch_model_forward.1} parent=0 // loop_header
    %s10 = sphi 0, %s14
    %p11 = scmp.ge.s32.totalorder %s10, 6
    %s20 = sphi 0, %s22
    %s23 = sphi 0, %s20
    %s24 = sphi 0, %s23
    %s40 = sphi 0, %s24
    %s44 = sphi 0, %s44
    %s46 = sphi 0, %s44
    %s47 = sphi 0, %s46
    %s61 = sphi 0, %s47
    %s65 = sphi 0, %s65
    %s67 = sphi 0, %s65
    %s68 = sphi 0, %s67
    %s82 = sphi 0, %s68
    %s86 = sphi 0, %s86
    %s88 = sphi 0, %s86
    %s89 = sphi 0, %s88
    %s103 = sphi 0, %s89
    %s109 = sphi 0, %s111
    %s112 = sphi 0, %s109
    %s113 = sphi 0, %s112
    %s129 = sphi 0, %s113
  $region4: #{torch_model_forward.1} parent=0 // loop_header_branch
    %13 = sbr.rel (%p11) target = $region8
  $region5: #{torch_model_forward.1} parent=0 // loop_body
    %s15 = ssub.s32 %s10, 1
    %s16 = ssub.s32 %s10, 2
    %s17 = sadd.s32 %s10, 1
    %s18 = ssub.s32 %s10, %s17
    %p19 = scmp.eq.s32.totalorder %s18, 0
    %s21 = sadd.s32 %s20, 1
    %s22 = scalar_select %p19, %s20, %s21
    %p25 = pneg %p19
    %p26 = scmp.eq.s32.totalorder %s10, 3
    %p27 = por %p25, %p26
    %p28 = scmp.ne.s32.totalorder %s20, %s23
    %p29 = scmp.eq.s32.totalorder %s10, 0
    %p30 = por %p28, %p29
    %p31 = scmp.ne.s32.totalorder %s20, %s23
    %p32 = scmp.eq.s32.totalorder %s15, 3
    %p33 = por %p31, %p32
    %p34 = scmp.ne.s32.totalorder %s23, %s24
    %p35 = scmp.eq.s32.totalorder %s15, 0
    %p36 = por %p34, %p35
    %p37 = scmp.ne.s32.totalorder %s23, %s24
    %p38 = scmp.eq.s32.totalorder %s16, 3
    %p39 = por %p37, %p38
    %p41 = scmp.ne.s32.totalorder %s24, %s40
    %p42 = scmp.eq.s32.totalorder %s16, 0
    %p43 = por %p41, %p42
    %s45 = sadd.s32 %s44, 1
    %p48 = scmp.eq.s32.totalorder %s10, 3
    %p49 = scmp.ne.s32.totalorder %s44, %s46
    %p50 = scmp.eq.s32.totalorder %s10, 0
    %p51 = por %p49, %p50
    %p52 = scmp.ne.s32.totalorder %s44, %s46
    %p53 = scmp.eq.s32.totalorder %s15, 3
    %p54 = por %p52, %p53
    %p55 = scmp.ne.s32.totalorder %s46, %s47
    %p56 = scmp.eq.s32.totalorder %s15, 0
    %p57 = por %p55, %p56
    %p58 = scmp.ne.s32.totalorder %s46, %s47
    %p59 = scmp.eq.s32.totalorder %s16, 3
    %p60 = por %p58, %p59
    %p62 = scmp.ne.s32.totalorder %s47, %s61
    %p63 = scmp.eq.s32.totalorder %s16, 0
    %p64 = por %p62, %p63
    %s66 = sadd.s32 %s65, 1
    %p69 = scmp.eq.s32.totalorder %s10, 3
    %p70 = scmp.ne.s32.totalorder %s65, %s67
    %p71 = scmp.eq.s32.totalorder %s10, 0
    %p72 = por %p70, %p71
    %p73 = scmp.ne.s32.totalorder %s65, %s67
    %p74 = scmp.eq.s32.totalorder %s15, 3
    %p75 = por %p73, %p74
    %p76 = scmp.ne.s32.totalorder %s67, %s68
    %p77 = scmp.eq.s32.totalorder %s15, 0
    %p78 = por %p76, %p77
    %p79 = scmp.ne.s32.totalorder %s67, %s68
    %p80 = scmp.eq.s32.totalorder %s16, 3
    %p81 = por %p79, %p80
    %p83 = scmp.ne.s32.totalorder %s68, %s82
    %p84 = scmp.eq.s32.totalorder %s16, 0
    %p85 = por %p83, %p84
    %s87 = sadd.s32 %s86, 1
    %p90 = scmp.eq.s32.totalorder %s10, 3
    %p91 = scmp.ne.s32.totalorder %s86, %s88
    %p92 = scmp.eq.s32.totalorder %s10, 0
    %p93 = por %p91, %p92
    %p94 = scmp.ne.s32.totalorder %s86, %s88
    %p95 = scmp.eq.s32.totalorder %s15, 3
    %p96 = por %p94, %p95
    %p97 = scmp.ne.s32.totalorder %s88, %s89
    %p98 = scmp.eq.s32.totalorder %s15, 0
    %p99 = por %p97, %p98
    %p100 = scmp.ne.s32.totalorder %s88, %s89
    %p101 = scmp.eq.s32.totalorder %s16, 3
    %p102 = por %p100, %p101
    %p104 = scmp.ne.s32.totalorder %s89, %s103
    %p105 = scmp.eq.s32.totalorder %s16, 0
    %p106 = por %p104, %p105
    %s107 = ssub.s32 %s10, %s17
    %p108 = scmp.eq.s32.totalorder %s107, 0
    %s110 = sadd.s32 %s109, 1
    %s111 = scalar_select %p108, %s109, %s110
    %p114 = pneg %p108
    %p115 = scmp.eq.s32.totalorder %s10, 3
    %p116 = por %p114, %p115
    %p117 = scmp.ne.s32.totalorder %s109, %s112
    %p118 = scmp.eq.s32.totalorder %s10, 0
    %p119 = por %p117, %p118
    %p120 = scmp.ne.s32.totalorder %s109, %s112
    %p121 = scmp.eq.s32.totalorder %s15, 3
    %p122 = por %p120, %p121
    %p123 = scmp.ne.s32.totalorder %s112, %s113
    %p124 = scmp.eq.s32.totalorder %s15, 0
    %p125 = por %p123, %p124
    %p126 = scmp.ne.s32.totalorder %s112, %s113
    %p127 = scmp.eq.s32.totalorder %s16, 3
    %p128 = por %p126, %p127
    %p130 = scmp.ne.s32.totalorder %s113, %s129
    %p131 = scmp.eq.s32.totalorder %s16, 0
    %p132 = por %p130, %p131
    %p133 = scmp.le.s32.totalorder 1, %s10
    %p134 = scmp.lt.s32.totalorder %s10, 5
    %p135 = pnand %p133, %p134
    %p136 = pneg %p135
    // Predicated region
    $region9: #{torch_model_forward.1} parent=5 // pred_check
      _
    $region10: #{torch_model_forward.1} parent=5 // pred_check_branch
      %138 = sbr.rel (%p135) target = $region12
    $region11: #{torch_model_forward.1} parent=5 // pred_region
      %s139 = ssub.s32 %s10, 1
      // Predicated region
      $region13: #{torch_model_forward.1} parent=11 // pred_check
        %p140 = pneg %p57
      $region14: #{torch_model_forward.1} parent=11 // pred_check_branch
        %142 = sbr.rel (%p140) target = $region16
      $region15: #{torch_model_forward.1} parent=11 // pred_region
        _
      $region16: #{torch_model_forward.1} parent=11 // pred_fallthru
        _
      // Predicated region
      $region17: #{torch_model_forward.1} parent=11 // pred_check
        %p143 = pneg %p78
      $region18: #{torch_model_forward.1} parent=11 // pred_check_branch
        %145 = sbr.rel (%p143) target = $region20
      $region19: #{torch_model_forward.1} parent=11 // pred_region
        _
      $region20: #{torch_model_forward.1} parent=11 // pred_fallthru
        _
      // Predicated region
      $region21: #{torch_model_forward.1} parent=11 // pred_check
        %p146 = pneg %p99
      $region22: #{torch_model_forward.1} parent=11 // pred_check_branch
        %148 = sbr.rel (%p146) target = $region24
      $region23: #{torch_model_forward.1} parent=11 // pred_region
        _
      $region24: #{torch_model_forward.1} parent=11 // pred_fallthru
        _
    $region12: #{torch_model_forward.1} parent=5 // pred_fallthru
      _
    %p149 = scmp.lt.s32.totalorder %s10, 4
    // Predicated region
    $region25: #{torch_model_forward.1} parent=5 // pred_check
      %p150 = pneg %p149
    $region26: #{torch_model_forward.1} parent=5 // pred_check_branch
      %152 = sbr.rel (%p150) target = $region28
    $region27: #{torch_model_forward.1} parent=5 // pred_region
      // Predicated region
      $region29: #{torch_model_forward.1} parent=27 // pred_check
        %p153 = pneg %p30
      $region30: #{torch_model_forward.1} parent=27 // pred_check_branch
        %155 = sbr.rel (%p153) target = $region32
      $region31: #{torch_model_forward.1} parent=27 // pred_region
        %s156 = smul.u32 4, %s10
        %p157 = scmp.lt.s32.totalorder %s156, 15
        %s158 = scalar_select %p157, %s156, 15
        %s159 = smul.addr %s158, 5
        %s160 = smul.addr %s159, 4
        %s161 = scalar_lea.vmem %s0, %s160
        %s162 = smul.u32 4, %s10
      $region32: #{torch_model_forward.1} parent=27 // pred_fallthru
        _
    $region28: #{torch_model_forward.1} parent=5 // pred_fallthru
      _
    %p163 = scmp.le.s32.totalorder 1, %s10
    %p164 = scmp.lt.s32.totalorder %s10, 5
    %p165 = pnand %p163, %p164
    %p166 = pneg %p165
    // Predicated region
    $region33: #{torch_model_forward.1} parent=5 // pred_check
      _
    $region34: #{torch_model_forward.1} parent=5 // pred_check_branch
      %168 = sbr.rel (%p165) target = $region36
    $region35: #{torch_model_forward.1} parent=5 // pred_region
      %s169 = ssub.s32 %s10, 1
      %s170 = smul.u32 4, %s15
      %p171 = scmp.lt.s32.totalorder %s170, 15
      %s172 = scalar_select %p171, %s170, 15
      %s173 = smul.addr %s172, 5
      %s174 = smul.addr %s173, 4
      %s175 = scalar_lea.vmem %s0, %s174
      %p176 = pneg %p36
      %p177 = pneg %p33
      %p178 = pneg %p57
      %p179 = pneg %p54
      %p180 = pneg %p78
      %p181 = pneg %p75
      %p182 = pneg %p99
      %p183 = pneg %p96
      %p184 = pneg %p125
      %p185 = pneg %p122
      %p186 = scmp.lt.s32.totalorder %s15, 3
      %s187 = scalar_select %p186, %s15, 3
      %s188 = smul.addr %s187, 4
      %s189 = scalar_lea.vmem %s4, %s188
      %s190 = smul.u32 4, %s15
      %p191 = scmp.lt.s32.totalorder %s190, 15
      %s192 = scalar_select %p191, %s190, 15
      %s193 = smul.addr %s192, 5
      %s194 = smul.addr %s193, 4
      %s195 = scalar_lea.vmem %s0, %s194
      %s196 = smul.u32 4, %s15
      %p197 = scmp.lt.s32.totalorder %s15, 3
      %s198 = scalar_select %p197, %s15, 3
      %s199 = smul.addr %s198, 4
      %s200 = scalar_lea.vmem %s4, %s199
      %v202 = vld [vmem:[%s195] sm:$0xf]
      %v203 = vld [vmem:[%s195 + $0x4] sm:$0xf]
      %v204 = vld [vmem:[%s195 + $0x8] sm:$0xf]
      %v205 = vld [vmem:[%s195 + $0xc] sm:$0xf]
      %v206 = vld [vmem:[%s195 + $0x14] sm:$0xf]
      %v207 = vld [vmem:[%s195 + $0x18] sm:$0xf]
      %v208 = vld [vmem:[%s195 + $0x1c] sm:$0xf]
      %v209 = vld [vmem:[%s195 + $0x20] sm:$0xf]
      %v210 = vld [vmem:[%s195 + $0x28] sm:$0xf]
      %v211 = vld [vmem:[%s195 + $0x2c] sm:$0xf]
      %v212 = vld [vmem:[%s195 + $0x30] sm:$0xf]
      %v213 = vld [vmem:[%s195 + $0x34] sm:$0xf]
      %v214 = vld [vmem:[%s195 + $0x3c] sm:$0xf]
      %v215 = vld [vmem:[%s195 + $0x40] sm:$0xf]
      %v216 = vld [vmem:[%s195 + $0x44] sm:$0xf]
      %v217 = vld [vmem:[%s195 + $0x48] sm:$0xf]
      %v218 = vld [vmem:[%s1] sm:$0xff]
      %v219 = vld [vmem:[%s1 + $0x8] sm:$0xff]
      %v220 = vld [vmem:[%s1 + $0x10] sm:$0xff]
      %v221 = vld [vmem:[%s1 + $0x18] sm:$0xff]
      %v222 = vld [vmem:[%s1 + $0x20] sm:$0xff]
      %v223 = vld [vmem:[%s1 + $0x28] sm:$0xff]
      %v224 = vld [vmem:[%s1 + $0x30] sm:$0xff]
      %v225 = vld [vmem:[%s1 + $0x38] sm:$0xff]
      %v226 = vld [vmem:[%s1 + $0x40] sm:$0xff]
      %v227 = vld [vmem:[%s1 + $0x48] sm:$0xff]
      %v228 = vld [vmem:[%s1 + $0x50] sm:$0xff]
      %v229 = vld [vmem:[%s1 + $0x58] sm:$0xff]
      %v230 = vld [vmem:[%s1 + $0x60] sm:$0xff]
      %v231 = vld [vmem:[%s1 + $0x68] sm:$0xff]
      %v232 = vld [vmem:[%s1 + $0x70] sm:$0xff]
      %v233 = vld [vmem:[%s1 + $0x78] sm:$0xff]
      %v234 = vld [vmem:[%s195 + $0x10] sm:$0x1]
      %v235 = vld [vmem:[%s195 + $0x24] sm:$0x1]
      %v236 = vld [vmem:[%s195 + $0x38] sm:$0x1]
      %v237 = vld [vmem:[%s195 + $0x4c] sm:$0x1]
      %vm238 = vsmask.f32 3328
      %vm239 = vsmask.f32 7440
      %vm240 = vmor %vm238, %vm239
      %v242 = vshrl.u32 %v202, 16
      %v244 = vrot.slane %v242, 4
      %v245 = vshll.u32 %v202, 16
      %v247 = vrot.slane %v245, 5
      %v248 = vor.u32 %v244, %v247
      %v249 = vrot.slane %v248, 4
      %v251 = vshll.u32 %v203, 16
      %v253 = vrot.slane %v251, 5
      %v254 = vsel %vm240, %v249, %v253
      %v255 = vshrl.u32 %v203, 16
      %v257 = vrot.slane %v255, 4
      %v258 = vor.u32 %v257, %v253
      %v259 = vrot.slane %v258, 4
      %v261 = vshll.u32 %v204, 16
      %v263 = vrot.slane %v261, 5
      %v264 = vsel %vm240, %v259, %v263
      %v265 = vshrl.u32 %v204, 16
      %v267 = vrot.slane %v265, 4
      %v268 = vor.u32 %v267, %v263
      %v269 = vrot.slane %v268, 4
      %v271 = vshll.u32 %v205, 16
      %v273 = vrot.slane %v271, 5
      %v274 = vsel %vm240, %v269, %v273
      %v275 = vshrl.u32 %v205, 16
      %v277 = vrot.slane %v275, 4
      %v278 = vor.u32 %v277, %v273
      %v279 = vrot.slane %v278, 4
      %v281 = vshll.u32 %v234, 16
      %v283 = vrot.slane %v281, 5
      %v284 = vsel %vm240, %v279, %v283
      %v286 = vshrl.u32 %v206, 16
      %v288 = vrot.slane %v286, 4
      %v289 = vshll.u32 %v206, 16
      %v291 = vrot.slane %v289, 5
      %v292 = vor.u32 %v288, %v291
      %v293 = vrot.slane %v292, 4
      %v295 = vshll.u32 %v207, 16
      %v297 = vrot.slane %v295, 5
      %v298 = vsel %vm240, %v293, %v297
      %v299 = vshrl.u32 %v207, 16
      %v301 = vrot.slane %v299, 4
      %v302 = vor.u32 %v301, %v297
      %v303 = vrot.slane %v302, 4
      %v305 = vshll.u32 %v208, 16
      %v307 = vrot.slane %v305, 5
      %v308 = vsel %vm240, %v303, %v307
      %v309 = vshrl.u32 %v208, 16
      %v311 = vrot.slane %v309, 4
      %v312 = vor.u32 %v311, %v307
      %v313 = vrot.slane %v312, 4
      %v315 = vshll.u32 %v209, 16
      %v317 = vrot.slane %v315, 5
      %v318 = vsel %vm240, %v313, %v317
      %v319 = vshrl.u32 %v209, 16
      %v321 = vrot.slane %v319, 4
      %v322 = vor.u32 %v321, %v317
      %v323 = vrot.slane %v322, 4
      %v325 = vshll.u32 %v235, 16
      %v327 = vrot.slane %v325, 5
      %v328 = vsel %vm240, %v323, %v327
      %v330 = vshrl.u32 %v210, 16
      %v332 = vrot.slane %v330, 4
      %v333 = vshll.u32 %v210, 16
      %v335 = vrot.slane %v333, 5
      %v336 = vor.u32 %v332, %v335
      %v337 = vrot.slane %v336, 4
      %v339 = vshll.u32 %v211, 16
      %v341 = vrot.slane %v339, 5
      %v342 = vsel %vm240, %v337, %v341
      %v343 = vshrl.u32 %v211, 16
      %v345 = vrot.slane %v343, 4
      %v346 = vor.u32 %v345, %v341
      %v347 = vrot.slane %v346, 4
      %v349 = vshll.u32 %v212, 16
      %v351 = vrot.slane %v349, 5
      %v352 = vsel %vm240, %v347, %v351
      %v353 = vshrl.u32 %v212, 16
      %v355 = vrot.slane %v353, 4
      %v356 = vor.u32 %v355, %v351
      %v357 = vrot.slane %v356, 4
      %v359 = vshll.u32 %v213, 16
      %v361 = vrot.slane %v359, 5
      %v362 = vsel %vm240, %v357, %v361
      %v363 = vshrl.u32 %v213, 16
      %v365 = vrot.slane %v363, 4
      %v366 = vor.u32 %v365, %v361
      %v367 = vrot.slane %v366, 4
      %v369 = vshll.u32 %v236, 16
      %v371 = vrot.slane %v369, 5
      %v372 = vsel %vm240, %v367, %v371
      %v374 = vshrl.u32 %v214, 16
      %v376 = vrot.slane %v374, 4
      %v377 = vshll.u32 %v214, 16
      %v379 = vrot.slane %v377, 5
      %v380 = vor.u32 %v376, %v379
      %v381 = vrot.slane %v380, 4
      %v383 = vshll.u32 %v215, 16
      %v385 = vrot.slane %v383, 5
      %v386 = vsel %vm240, %v381, %v385
      %v387 = vshrl.u32 %v215, 16
      %v389 = vrot.slane %v387, 4
      %v390 = vor.u32 %v389, %v385
      %v391 = vrot.slane %v390, 4
      %v393 = vshll.u32 %v216, 16
      %v395 = vrot.slane %v393, 5
      %v396 = vsel %vm240, %v391, %v395
      %v397 = vshrl.u32 %v216, 16
      %v399 = vrot.slane %v397, 4
      %v400 = vor.u32 %v399, %v395
      %v401 = vrot.slane %v400, 4
      %v403 = vshll.u32 %v217, 16
      %v405 = vrot.slane %v403, 5
      %v406 = vsel %vm240, %v401, %v405
      %v407 = vshrl.u32 %v217, 16
      %v409 = vrot.slane %v407, 4
      %v410 = vor.u32 %v409, %v405
      %v411 = vrot.slane %v410, 4
      %v413 = vshll.u32 %v237, 16
      %v415 = vrot.slane %v413, 5
      %v416 = vsel %vm240, %v411, %v415
      %s417 = scalar_lea.vmem %s1, 128
      %v418 = vld [vmem:[%s417] sm:$0xff]
      %v419 = vld [vmem:[%s417 + $0x8] sm:$0xff]
      %v420 = vld [vmem:[%s417 + $0x10] sm:$0xff]
      %v421 = vld [vmem:[%s417 + $0x18] sm:$0xff]
      %v422 = vld [vmem:[%s417 + $0x20] sm:$0xff]
      %v423 = vld [vmem:[%s417 + $0x28] sm:$0xff]
      %v424 = vld [vmem:[%s417 + $0x30] sm:$0xff]
      %v425 = vld [vmem:[%s417 + $0x38] sm:$0xff]
      %v426 = vld [vmem:[%s417 + $0x40] sm:$0xff]
      %v427 = vld [vmem:[%s417 + $0x48] sm:$0xff]
      %v428 = vld [vmem:[%s417 + $0x50] sm:$0xff]
      %v429 = vld [vmem:[%s417 + $0x58] sm:$0xff]
      %v430 = vld [vmem:[%s417 + $0x60] sm:$0xff]
      %v431 = vld [vmem:[%s417 + $0x68] sm:$0xff]
      %v432 = vld [vmem:[%s417 + $0x70] sm:$0xff]
      %v433 = vld [vmem:[%s417 + $0x78] sm:$0xff]
      %v434 = vunpack.c.l.b16 %v254
      %v435 = vunpack.c.l.b16 %v264
      %v436 = vunpack.c.l.b16 %v274
      %v437 = vunpack.c.l.b16 %v284
      %v438 = vunpack.c.l.b16 %v298
      %v439 = vunpack.c.l.b16 %v308
      %v440 = vunpack.c.l.b16 %v318
      %v441 = vunpack.c.l.b16 %v328
      %v442 = vunpack.c.l.b16 %v342
      %v443 = vunpack.c.l.b16 %v352
      %v444 = vunpack.c.l.b16 %v362
      %v445 = vunpack.c.l.b16 %v372
      %v446 = vunpack.c.l.b16 %v386
      %v447 = vunpack.c.l.b16 %v396
      %v448 = vunpack.c.l.b16 %v406
      %v449 = vunpack.c.l.b16 %v416
      %v450 = vpack.c.b16 %v435, %v434
      %v451 = vpack.c.b16 %v437, %v436
      %v452 = vpack.c.b16 %v439, %v438
      %v453 = vpack.c.b16 %v441, %v440
      %v454 = vpack.c.b16 %v443, %v442
      %v455 = vpack.c.b16 %v445, %v444
      %v456 = vpack.c.b16 %v447, %v446
      %v457 = vpack.c.b16 %v449, %v448
      %v482 = vunpack.c.l.b16 %v418
      %v483 = vunpack.c.h.b16 %v418
      %v484 = vunpack.c.l.b16 %v419
      %v485 = vunpack.c.h.b16 %v419
      %v486 = vunpack.c.l.b16 %v420
      %v487 = vunpack.c.h.b16 %v420
      %v488 = vunpack.c.l.b16 %v421
      %v489 = vunpack.c.h.b16 %v421
      %v490 = vunpack.c.l.b16 %v422
      %v491 = vunpack.c.h.b16 %v422
      %v492 = vunpack.c.l.b16 %v423
      %v493 = vunpack.c.h.b16 %v423
      %v494 = vunpack.c.l.b16 %v424
      %v495 = vunpack.c.h.b16 %v424
      %v496 = vunpack.c.l.b16 %v425
      %v497 = vunpack.c.h.b16 %v425
      %v498 = vunpack.c.l.b16 %v426
      %v499 = vunpack.c.h.b16 %v426
      %v500 = vunpack.c.l.b16 %v427
      %v501 = vunpack.c.h.b16 %v427
      %v502 = vunpack.c.l.b16 %v428
      %v503 = vunpack.c.h.b16 %v428
      %v504 = vunpack.c.l.b16 %v429
      %v505 = vunpack.c.h.b16 %v429
      %v506 = vunpack.c.l.b16 %v430
      %v507 = vunpack.c.h.b16 %v430
      %v508 = vunpack.c.l.b16 %v431
      %v509 = vunpack.c.h.b16 %v431
      %v510 = vunpack.c.l.b16 %v432
      %v511 = vunpack.c.h.b16 %v432
      %v512 = vunpack.c.l.b16 %v433
      %v513 = vunpack.c.h.b16 %v433
      %v514 = vpack.c.b16 %v484, %v482
      %v515 = vpack.c.b16 %v485, %v483
      %v516 = vpack.c.b16 %v488, %v486
      %v517 = vpack.c.b16 %v489, %v487
      %v518 = vpack.c.b16 %v492, %v490
      %v519 = vpack.c.b16 %v493, %v491
      %v520 = vpack.c.b16 %v496, %v494
      %v521 = vpack.c.b16 %v497, %v495
      %v522 = vpack.c.b16 %v500, %v498
      %v523 = vpack.c.b16 %v501, %v499
      %v524 = vpack.c.b16 %v504, %v502
      %v525 = vpack.c.b16 %v505, %v503
      %v526 = vpack.c.b16 %v508, %v506
      %v527 = vpack.c.b16 %v509, %v507
      %v528 = vpack.c.b16 %v512, %v510
      %v529 = vpack.c.b16 %v513, %v511
      %546 = vmatprep.subr.bf16.mxu0 %v515
      %547 = vmatpush1.bf16.msra.mxu0 %v514
      %548 = vmatprep.subr.bf16.mxu0 %v517
      %549 = vmatpush1.bf16.msra.mxu0 %v516
      %550 = vmatprep.subr.bf16.mxu0 %v519
      %551 = vmatpush1.bf16.msra.mxu0 %v518
      %552 = vmatprep.subr.bf16.mxu0 %v521
      %553 = vmatpush1.bf16.msra.mxu0 %v520
      %554 = vmatprep.subr.bf16.mxu0 %v523
      %555 = vmatpush1.bf16.msra.mxu0 %v522
      %556 = vmatprep.subr.bf16.mxu0 %v525
      %557 = vmatpush1.bf16.msra.mxu0 %v524
      %558 = vmatprep.subr.bf16.mxu0 %v527
      %559 = vmatpush1.bf16.msra.mxu0 %v526
      %560 = vmatprep.subr.bf16.mxu0 %v529
      %561 = vmatpush1.bf16.msra.mxu0 %v528
      %562 = vmatprep.subr.bf16.mxu0 0
      %563 = vmatpush1.bf16.msra.mxu0 0
      %564 = vmatprep.subr.bf16.mxu0 0
      %565 = vmatpush1.bf16.msra.mxu0 0
      %566 = vmatprep.subr.bf16.mxu0 0
      %567 = vmatpush1.bf16.msra.mxu0 0
      %568 = vmatprep.subr.bf16.mxu0 0
      %569 = vmatpush1.bf16.msra.mxu0 0
      %570 = vmatprep.subr.bf16.mxu0 0
      %571 = vmatpush1.bf16.msra.mxu0 0
      %572 = vmatprep.subr.bf16.mxu0 0
      %573 = vmatpush1.bf16.msra.mxu0 0
      %574 = vmatprep.subr.bf16.mxu0 0
      %575 = vmatpush1.bf16.msra.mxu0 0
      %576 = vmatprep.subr.bf16.mxu0 0
      %577 = vmatpush1.bf16.msra.mxu0 0
      %578 = vmatprep.mubr.bf16.mxu0 0
      %579 = vmatmul.mubr.bf16.gmra.mrb[0].mxu0 %v450
      %v580 = vpop.f32.mrb[0].mxu0
      %v581 = vadd.f32 0.0, %v580
      %v582 = vpop.f32.mrb[0].mxu0
      %v583 = vadd.f32 0.0, %v582
      %v584 = vpop.f32.mrb[0].mxu0
      %v585 = vadd.f32 0.0, %v584
      %v586 = vpop.f32.mrb[0].mxu0
      %v587 = vadd.f32 0.0, %v586
      %588 = vmatprep.mubr.bf16.mxu0 0
      %589 = vmatmul.mubr.bf16.gmra.mrb[0].mxu0 %v451
      %v590 = vpop.f32.mrb[0].mxu0
      %v591 = vadd.f32 0.0, %v590
      %v592 = vpop.f32.mrb[0].mxu0
      %v593 = vadd.f32 0.0, %v592
      %v594 = vpop.f32.mrb[0].mxu0
      %v595 = vadd.f32 0.0, %v594
      %v596 = vpop.f32.mrb[0].mxu0
      %v597 = vadd.f32 0.0, %v596
      %598 = vmatprep.mubr.bf16.mxu0 0
      %599 = vmatmul.mubr.bf16.gmra.mrb[0].mxu0 %v452
      %v600 = vpop.f32.mrb[0].mxu0
      %v601 = vadd.f32 0.0, %v600
      %v602 = vpop.f32.mrb[0].mxu0
      %v603 = vadd.f32 0.0, %v602
      %v604 = vpop.f32.mrb[0].mxu0
      %v605 = vadd.f32 0.0, %v604
      %v606 = vpop.f32.mrb[0].mxu0
      %v607 = vadd.f32 0.0, %v606
      %608 = vmatprep.mubr.bf16.mxu0 0
      %609 = vmatmul.mubr.bf16.gmra.mrb[0].mxu0 %v453
      %v610 = vpop.f32.mrb[0].mxu0
      %v611 = vadd.f32 0.0, %v610
      %v612 = vpop.f32.mrb[0].mxu0
      %v613 = vadd.f32 0.0, %v612
      %v614 = vpop.f32.mrb[0].mxu0
      %v615 = vadd.f32 0.0, %v614
      %v616 = vpop.f32.mrb[0].mxu0
      %v617 = vadd.f32 0.0, %v616
      %618 = vmatprep.mubr.bf16.mxu0 0
      %619 = vmatmul.mubr.bf16.gmra.mrb[0].mxu0 %v454
      %v620 = vpop.f32.mrb[0].mxu0
      %v621 = vadd.f32 0.0, %v620
      %v622 = vpop.f32.mrb[0].mxu0
      %v623 = vadd.f32 0.0, %v622
      %v624 = vpop.f32.mrb[0].mxu0
      %v625 = vadd.f32 0.0, %v624
      %v626 = vpop.f32.mrb[0].mxu0
      %v627 = vadd.f32 0.0, %v626
      %628 = vmatprep.mubr.bf16.mxu0 0
      %629 = vmatmul.mubr.bf16.gmra.mrb[0].mxu0 %v455
      %v630 = vpop.f32.mrb[0].mxu0
      %v631 = vadd.f32 0.0, %v630
      %v632 = vpop.f32.mrb[0].mxu0
      %v633 = vadd.f32 0.0, %v632
      %v634 = vpop.f32.mrb[0].mxu0
      %v635 = vadd.f32 0.0, %v634
      %v636 = vpop.f32.mrb[0].mxu0
      %v637 = vadd.f32 0.0, %v636
      %638 = vmatprep.mubr.bf16.mxu0 0
      %639 = vmatmul.mubr.bf16.gmra.mrb[0].mxu0 %v456
      %v640 = vpop.f32.mrb[0].mxu0
      %v641 = vadd.f32 0.0, %v640
      %v642 = vpop.f32.mrb[0].mxu0
      %v643 = vadd.f32 0.0, %v642
      %v644 = vpop.f32.mrb[0].mxu0
      %v645 = vadd.f32 0.0, %v644
      %v646 = vpop.f32.mrb[0].mxu0
      %v647 = vadd.f32 0.0, %v646
      %648 = vmatprep.mubr.bf16.mxu0 0
      %649 = vmatmul.mubr.bf16.gmra.mrb[0].mxu0 %v457
      %v650 = vpop.f32.mrb[0].mxu0
      %v651 = vadd.f32 0.0, %v650
      %v652 = vpop.f32.mrb[0].mxu0
      %v653 = vadd.f32 0.0, %v652
      %v654 = vpop.f32.mrb[0].mxu0
      %v655 = vadd.f32 0.0, %v654
      %v656 = vpop.f32.mrb[0].mxu0
      %v657 = vadd.f32 0.0, %v656
      %658 = vdwg.mxu0
      %v675 = vunpack.c.l.b16 %v202
      %v676 = vunpack.c.l.b16 %v203
      %v677 = vunpack.c.l.b16 %v204
      %v678 = vunpack.c.l.b16 %v205
      %v679 = vunpack.c.l.b16 %v206
      %v680 = vunpack.c.l.b16 %v207
      %v681 = vunpack.c.l.b16 %v208
      %v682 = vunpack.c.l.b16 %v209
      %v683 = vunpack.c.l.b16 %v210
      %v684 = vunpack.c.l.b16 %v211
      %v685 = vunpack.c.l.b16 %v212
      %v686 = vunpack.c.l.b16 %v213
      %v687 = vunpack.c.l.b16 %v214
      %v688 = vunpack.c.l.b16 %v215
      %v689 = vunpack.c.l.b16 %v216
      %v690 = vunpack.c.l.b16 %v217
      %v691 = vpack.c.b16 %v676, %v675
      %v692 = vpack.c.b16 %v678, %v677
      %v693 = vpack.c.b16 %v680, %v679
      %v694 = vpack.c.b16 %v682, %v681
      %v695 = vpack.c.b16 %v684, %v683
      %v696 = vpack.c.b16 %v686, %v685
      %v697 = vpack.c.b16 %v688, %v687
      %v698 = vpack.c.b16 %v690, %v689
      %v723 = vunpack.c.l.b16 %v218
      %v724 = vunpack.c.h.b16 %v218
      %v725 = vunpack.c.l.b16 %v219
      %v726 = vunpack.c.h.b16 %v219
      %v727 = vunpack.c.l.b16 %v220
      %v728 = vunpack.c.h.b16 %v220
      %v729 = vunpack.c.l.b16 %v221
      %v730 = vunpack.c.h.b16 %v221
      %v731 = vunpack.c.l.b16 %v222
      %v732 = vunpack.c.h.b16 %v222
      %v733 = vunpack.c.l.b16 %v223
      %v734 = vunpack.c.h.b16 %v223
      %v735 = vunpack.c.l.b16 %v224
      %v736 = vunpack.c.h.b16 %v224
      %v737 = vunpack.c.l.b16 %v225
      %v738 = vunpack.c.h.b16 %v225
      %v739 = vunpack.c.l.b16 %v226
      %v740 = vunpack.c.h.b16 %v226
      %v741 = vunpack.c.l.b16 %v227
      %v742 = vunpack.c.h.b16 %v227
      %v743 = vunpack.c.l.b16 %v228
      %v744 = vunpack.c.h.b16 %v228
      %v745 = vunpack.c.l.b16 %v229
      %v746 = vunpack.c.h.b16 %v229
      %v747 = vunpack.c.l.b16 %v230
      %v748 = vunpack.c.h.b16 %v230
      %v749 = vunpack.c.l.b16 %v231
      %v750 = vunpack.c.h.b16 %v231
      %v751 = vunpack.c.l.b16 %v232
      %v752 = vunpack.c.h.b16 %v232
      %v753 = vunpack.c.l.b16 %v233
      %v754 = vunpack.c.h.b16 %v233
      %v755 = vpack.c.b16 %v725, %v723
      %v756 = vpack.c.b16 %v726, %v724
      %v757 = vpack.c.b16 %v729, %v727
      %v758 = vpack.c.b16 %v730, %v728
      %v759 = vpack.c.b16 %v733, %v731
      %v760 = vpack.c.b16 %v734, %v732
      %v761 = vpack.c.b16 %v737, %v735
      %v762 = vpack.c.b16 %v738, %v736
      %v763 = vpack.c.b16 %v741, %v739
      %v764 = vpack.c.b16 %v742, %v740
      %v765 = vpack.c.b16 %v745, %v743
      %v766 = vpack.c.b16 %v746, %v744
      %v767 = vpack.c.b16 %v749, %v747
      %v768 = vpack.c.b16 %v750, %v748
      %v769 = vpack.c.b16 %v753, %v751
      %v770 = vpack.c.b16 %v754, %v752
      %787 = vmatprep.subr.bf16.mxu0 %v756
      %788 = vmatpush1.bf16.msra.mxu0 %v755
      %789 = vmatprep.subr.bf16.mxu0 %v758
      %790 = vmatpush1.bf16.msra.mxu0 %v757
      %791 = vmatprep.subr.bf16.mxu0 %v760
      %792 = vmatpush1.bf16.msra.mxu0 %v759
      %793 = vmatprep.subr.bf16.mxu0 %v762
      %794 = vmatpush1.bf16.msra.mxu0 %v761
      %795 = vmatprep.subr.bf16.mxu0 %v764
      %796 = vmatpush1.bf16.msra.mxu0 %v763
      %797 = vmatprep.subr.bf16.mxu0 %v766
      %798 = vmatpush1.bf16.msra.mxu0 %v765
      %799 = vmatprep.subr.bf16.mxu0 %v768
      %800 = vmatpush1.bf16.msra.mxu0 %v767
      %801 = vmatprep.subr.bf16.mxu0 %v770
      %802 = vmatpush1.bf16.msra.mxu0 %v769
      %803 = vmatprep.subr.bf16.mxu0 0
      %804 = vmatpush1.bf16.msra.mxu0 0
      %805 = vmatprep.subr.bf16.mxu0 0
      %806 = vmatpush1.bf16.msra.mxu0 0
      %807 = vmatprep.subr.bf16.mxu0 0
      %808 = vmatpush1.bf16.msra.mxu0 0
      %809 = vmatprep.subr.bf16.mxu0 0
      %810 = vmatpush1.bf16.msra.mxu0 0
      %811 = vmatprep.subr.bf16.mxu0 0
      %812 = vmatpush1.bf16.msra.mxu0 0
      %813 = vmatprep.subr.bf16.mxu0 0
      %814 = vmatpush1.bf16.msra.mxu0 0
      %815 = vmatprep.subr.bf16.mxu0 0
      %816 = vmatpush1.bf16.msra.mxu0 0
      %817 = vmatprep.subr.bf16.mxu0 0
      %818 = vmatpush1.bf16.msra.mxu0 0
      %819 = vmatprep.mubr.bf16.mxu0 0
      %820 = vmatmul.mubr.bf16.gmra.mrb[0].mxu0 %v691
      %v821 = vpop.f32.mrb[0].mxu0
      %v822 = vadd.f32 %v581, %v821
      %v823 = vpop.f32.mrb[0].mxu0
      %v824 = vadd.f32 %v583, %v823
      %v825 = vpop.f32.mrb[0].mxu0
      %v826 = vadd.f32 %v585, %v825
      %v827 = vpop.f32.mrb[0].mxu0
      %v828 = vadd.f32 %v587, %v827
      %829 = vmatprep.mubr.bf16.mxu0 0
      %830 = vmatmul.mubr.bf16.gmra.mrb[0].mxu0 %v692
      %v831 = vpop.f32.mrb[0].mxu0
      %v832 = vadd.f32 %v591, %v831
      %v833 = vpop.f32.mrb[0].mxu0
      %v834 = vadd.f32 %v593, %v833
      %v835 = vpop.f32.mrb[0].mxu0
      %v836 = vadd.f32 %v595, %v835
      %v837 = vpop.f32.mrb[0].mxu0
      %v838 = vadd.f32 %v597, %v837
      %839 = vmatprep.mubr.bf16.mxu0 0
      %840 = vmatmul.mubr.bf16.gmra.mrb[0].mxu0 %v693
      %v841 = vpop.f32.mrb[0].mxu0
      %v842 = vadd.f32 %v601, %v841
      %v843 = vpop.f32.mrb[0].mxu0
      %v844 = vadd.f32 %v603, %v843
      %v845 = vpop.f32.mrb[0].mxu0
      %v846 = vadd.f32 %v605, %v845
      %v847 = vpop.f32.mrb[0].mxu0
      %v848 = vadd.f32 %v607, %v847
      %849 = vmatprep.mubr.bf16.mxu0 0
      %850 = vmatmul.mubr.bf16.gmra.mrb[0].mxu0 %v694
      %v851 = vpop.f32.mrb[0].mxu0
      %v852 = vadd.f32 %v611, %v851
      %v853 = vpop.f32.mrb[0].mxu0
      %v854 = vadd.f32 %v613, %v853
      %v855 = vpop.f32.mrb[0].mxu0
      %v856 = vadd.f32 %v615, %v855
      %v857 = vpop.f32.mrb[0].mxu0
      %v858 = vadd.f32 %v617, %v857
      %859 = vmatprep.mubr.bf16.mxu0 0
      %860 = vmatmul.mubr.bf16.gmra.mrb[0].mxu0 %v695
      %v861 = vpop.f32.mrb[0].mxu0
      %v862 = vadd.f32 %v621, %v861
      %v863 = vpop.f32.mrb[0].mxu0
      %v864 = vadd.f32 %v623, %v863
      %v865 = vpop.f32.mrb[0].mxu0
      %v866 = vadd.f32 %v625, %v865
      %v867 = vpop.f32.mrb[0].mxu0
      %v868 = vadd.f32 %v627, %v867
      %869 = vmatprep.mubr.bf16.mxu0 0
      %870 = vmatmul.mubr.bf16.gmra.mrb[0].mxu0 %v696
      %v871 = vpop.f32.mrb[0].mxu0
      %v872 = vadd.f32 %v631, %v871
      %v873 = vpop.f32.mrb[0].mxu0
      %v874 = vadd.f32 %v633, %v873
      %v875 = vpop.f32.mrb[0].mxu0
      %v876 = vadd.f32 %v635, %v875
      %v877 = vpop.f32.mrb[0].mxu0
      %v878 = vadd.f32 %v637, %v877
      %879 = vmatprep.mubr.bf16.mxu0 0
      %880 = vmatmul.mubr.bf16.gmra.mrb[0].mxu0 %v697
      %v881 = vpop.f32.mrb[0].mxu0
      %v882 = vadd.f32 %v641, %v881
      %v883 = vpop.f32.mrb[0].mxu0
      %v884 = vadd.f32 %v643, %v883
      %v885 = vpop.f32.mrb[0].mxu0
      %v886 = vadd.f32 %v645, %v885
      %v887 = vpop.f32.mrb[0].mxu0
      %v888 = vadd.f32 %v647, %v887
      %889 = vmatprep.mubr.bf16.mxu0 0
      %890 = vmatmul.mubr.bf16.gmra.mrb[0].mxu0 %v698
      %v891 = vpop.f32.mrb[0].mxu0
      %v892 = vadd.f32 %v651, %v891
      %v893 = vpop.f32.mrb[0].mxu0
      %v894 = vadd.f32 %v653, %v893
      %v895 = vpop.f32.mrb[0].mxu0
      %v896 = vadd.f32 %v655, %v895
      %v897 = vpop.f32.mrb[0].mxu0
      %v898 = vadd.f32 %v657, %v897
      %899 = vdwg.mxu0
      %v900 = vld [vmem:[%s195] sm:$0xe]
      %v901 = vld [vmem:[%s195 + $0x14] sm:$0xe]
      %v902 = vld [vmem:[%s195 + $0x28] sm:$0xe]
      %v903 = vld [vmem:[%s195 + $0x3c] sm:$0xe]
      %vm912 = vcmask 1042432
      %vm913 = vcmask 1046532
      %vm914 = vmor %vm912, %vm913
      %v915 = vrot.slane %v900, 5
      %v916 = vrot.slane %v915, 4
      %v917 = vrot.slane %v203, 5
      %v918 = vsel %vm914, %v916, %v917
      %v919 = vrot.slane %v917, 4
      %v920 = vrot.slane %v204, 5
      %v921 = vsel %vm914, %v919, %v920
      %v922 = vrot.slane %v920, 4
      %v923 = vrot.slane %v205, 5
      %v924 = vsel %vm914, %v922, %v923
      %v925 = vrot.slane %v923, 4
      %v926 = vrot.slane %v234, 5
      %v927 = vsel %vm914, %v925, %v926
      %v928 = vrot.slane %v901, 5
      %v929 = vrot.slane %v928, 4
      %v930 = vrot.slane %v207, 5
      %v931 = vsel %vm914, %v929, %v930
      %v932 = vrot.slane %v930, 4
      %v933 = vrot.slane %v208, 5
      %v934 = vsel %vm914, %v932, %v933
      %v935 = vrot.slane %v933, 4
      %v936 = vrot.slane %v209, 5
      %v937 = vsel %vm914, %v935, %v936
      %v938 = vrot.slane %v936, 4
      %v939 = vrot.slane %v235, 5
      %v940 = vsel %vm914, %v938, %v939
      %v941 = vrot.slane %v902, 5
      %v942 = vrot.slane %v941, 4
      %v943 = vrot.slane %v211, 5
      %v944 = vsel %vm914, %v942, %v943
      %v945 = vrot.slane %v943, 4
      %v946 = vrot.slane %v212, 5
      %v947 = vsel %vm914, %v945, %v946
      %v948 = vrot.slane %v946, 4
      %v949 = vrot.slane %v213, 5
      %v950 = vsel %vm914, %v948, %v949
      %v951 = vrot.slane %v949, 4
      %v952 = vrot.slane %v236, 5
      %v953 = vsel %vm914, %v951, %v952
      %v954 = vrot.slane %v903, 5
      %v955 = vrot.slane %v954, 4
      %v956 = vrot.slane %v215, 5
      %v957 = vsel %vm914, %v955, %v956
      %v958 = vrot.slane %v956, 4
      %v959 = vrot.slane %v216, 5
      %v960 = vsel %vm914, %v958, %v959
      %v961 = vrot.slane %v959, 4
      %v962 = vrot.slane %v217, 5
      %v963 = vsel %vm914, %v961, %v962
      %v964 = vrot.slane %v962, 4
      %v965 = vrot.slane %v237, 5
      %v966 = vsel %vm914, %v964, %v965
      %s967 = scalar_lea.vmem %s1, 256
      %v968 = vld [vmem:[%s967] sm:$0xff]
      %v969 = vld [vmem:[%s967 + $0x8] sm:$0xff]
      %v970 = vld [vmem:[%s967 + $0x10] sm:$0xff]
      %v971 = vld [vmem:[%s967 + $0x18] sm:$0xff]
      %v972 = vld [vmem:[%s967 + $0x20] sm:$0xff]
      %v973 = vld [vmem:[%s967 + $0x28] sm:$0xff]
      %v974 = vld [vmem:[%s967 + $0x30] sm:$0xff]
      %v975 = vld [vmem:[%s967 + $0x38] sm:$0xff]
      %v976 = vld [vmem:[%s967 + $0x40] sm:$0xff]
      %v977 = vld [vmem:[%s967 + $0x48] sm:$0xff]
      %v978 = vld [vmem:[%s967 + $0x50] sm:$0xff]
      %v979 = vld [vmem:[%s967 + $0x58] sm:$0xff]
      %v980 = vld [vmem:[%s967 + $0x60] sm:$0xff]
      %v981 = vld [vmem:[%s967 + $0x68] sm:$0xff]
      %v982 = vld [vmem:[%s967 + $0x70] sm:$0xff]
      %v983 = vld [vmem:[%s967 + $0x78] sm:$0xff]
      %v984 = vunpack.c.l.b16 %v918
      %v985 = vunpack.c.l.b16 %v921
      %v986 = vunpack.c.l.b16 %v924
      %v987 = vunpack.c.l.b16 %v927
      %v988 = vunpack.c.l.b16 %v931
      %v989 = vunpack.c.l.b16 %v934
      %v990 = vunpack.c.l.b16 %v937
      %v991 = vunpack.c.l.b16 %v940
      %v992 = vunpack.c.l.b16 %v944
      %v993 = vunpack.c.l.b16 %v947
      %v994 = vunpack.c.l.b16 %v950
      %v995 = vunpack.c.l.b16 %v953
      %v996 = vunpack.c.l.b16 %v957
      %v997 = vunpack.c.l.b16 %v960
      %v998 = vunpack.c.l.b16 %v963
      %v999 = vunpack.c.l.b16 %v966
      %v1000 = vpack.c.b16 %v985, %v984
      %v1001 = vpack.c.b16 %v987, %v986
      %v1002 = vpack.c.b16 %v989, %v988
      %v1003 = vpack.c.b16 %v991, %v990
      %v1004 = vpack.c.b16 %v993, %v992
      %v1005 = vpack.c.b16 %v995, %v994
      %v1006 = vpack.c.b16 %v997, %v996
      %v1007 = vpack.c.b16 %v999, %v998
      %v1032 = vunpack.c.l.b16 %v968
      %v1033 = vunpack.c.h.b16 %v968
      %v1034 = vunpack.c.l.b16 %v969
      %v1035 = vunpack.c.h.b16 %v969
      %v1036 = vunpack.c.l.b16 %v970
      %v1037 = vunpack.c.h.b16 %v970
      %v1038 = vunpack.c.l.b16 %v971
      %v1039 = vunpack.c.h.b16 %v971
      %v1040 = vunpack.c.l.b16 %v972
      %v1041 = vunpack.c.h.b16 %v972
      %v1042 = vunpack.c.l.b16 %v973
      %v1043 = vunpack.c.h.b16 %v973
      %v1044 = vunpack.c.l.b16 %v974
      %v1045 = vunpack.c.h.b16 %v974
      %v1046 = vunpack.c.l.b16 %v975
      %v1047 = vunpack.c.h.b16 %v975
      %v1048 = vunpack.c.l.b16 %v976
      %v1049 = vunpack.c.h.b16 %v976
      %v1050 = vunpack.c.l.b16 %v977
      %v1051 = vunpack.c.h.b16 %v977
      %v1052 = vunpack.c.l.b16 %v978
      %v1053 = vunpack.c.h.b16 %v978
      %v1054 = vunpack.c.l.b16 %v979
      %v1055 = vunpack.c.h.b16 %v979
      %v1056 = vunpack.c.l.b16 %v980
      %v1057 = vunpack.c.h.b16 %v980
      %v1058 = vunpack.c.l.b16 %v981
      %v1059 = vunpack.c.h.b16 %v981
      %v1060 = vunpack.c.l.b16 %v982
      %v1061 = vunpack.c.h.b16 %v982
      %v1062 = vunpack.c.l.b16 %v983
      %v1063 = vunpack.c.h.b16 %v983
      %v1064 = vpack.c.b16 %v1034, %v1032
      %v1065 = vpack.c.b16 %v1035, %v1033
      %v1066 = vpack.c.b16 %v1038, %v1036
      %v1067 = vpack.c.b16 %v1039, %v1037
      %v1068 = vpack.c.b16 %v1042, %v1040
      %v1069 = vpack.c.b16 %v1043, %v1041
      %v1070 = vpack.c.b16 %v1046, %v1044
      %v1071 = vpack.c.b16 %v1047, %v1045
      %v1072 = vpack.c.b16 %v1050, %v1048
      %v1073 = vpack.c.b16 %v1051, %v1049
      %v1074 = vpack.c.b16 %v1054, %v1052
      %v1075 = vpack.c.b16 %v1055, %v1053
      %v1076 = vpack.c.b16 %v1058, %v1056
      %v1077 = vpack.c.b16 %v1059, %v1057
      %v1078 = vpack.c.b16 %v1062, %v1060
      %v1079 = vpack.c.b16 %v1063, %v1061
      %1096 = vmatprep.subr.bf16.mxu0 %v1065
      %1097 = vmatpush1.bf16.msra.mxu0 %v1064
      %1098 = vmatprep.subr.bf16.mxu0 %v1067
      %1099 = vmatpush1.bf16.msra.mxu0 %v1066
      %1100 = vmatprep.subr.bf16.mxu0 %v1069
      %1101 = vmatpush1.bf16.msra.mxu0 %v1068
      %1102 = vmatprep.subr.bf16.mxu0 %v1071
      %1103 = vmatpush1.bf16.msra.mxu0 %v1070
      %1104 = vmatprep.subr.bf16.mxu0 %v1073
      %1105 = vmatpush1.bf16.msra.mxu0 %v1072
      %1106 = vmatprep.subr.bf16.mxu0 %v1075
      %1107 = vmatpush1.bf16.msra.mxu0 %v1074
      %1108 = vmatprep.subr.bf16.mxu0 %v1077
      %1109 = vmatpush1.bf16.msra.mxu0 %v1076
      %1110 = vmatprep.subr.bf16.mxu0 %v1079
      %1111 = vmatpush1.bf16.msra.mxu0 %v1078
      %1112 = vmatprep.subr.bf16.mxu0 0
      %1113 = vmatpush1.bf16.msra.mxu0 0
      %1114 = vmatprep.subr.bf16.mxu0 0
      %1115 = vmatpush1.bf16.msra.mxu0 0
      %1116 = vmatprep.subr.bf16.mxu0 0
      %1117 = vmatpush1.bf16.msra.mxu0 0
      %1118 = vmatprep.subr.bf16.mxu0 0
      %1119 = vmatpush1.bf16.msra.mxu0 0
      %1120 = vmatprep.subr.bf16.mxu0 0
      %1121 = vmatpush1.bf16.msra.mxu0 0
      %1122 = vmatprep.subr.bf16.mxu0 0
      %1123 = vmatpush1.bf16.msra.mxu0 0
      %1124 = vmatprep.subr.bf16.mxu0 0
      %1125 = vmatpush1.bf16.msra.mxu0 0
      %1126 = vmatprep.subr.bf16.mxu0 0
      %1127 = vmatpush1.bf16.msra.mxu0 0
      %1128 = vmatprep.mubr.bf16.mxu0 0
      %1129 = vmatmul.mubr.bf16.gmra.mrb[0].mxu0 %v1000
      %v1130 = vpop.f32.mrb[0].mxu0
      %v1131 = vadd.f32 0.0, %v1130
      %v1132 = vpop.f32.mrb[0].mxu0
      %v1133 = vadd.f32 0.0, %v1132
      %v1134 = vpop.f32.mrb[0].mxu0
      %v1135 = vadd.f32 0.0, %v1134
      %v1136 = vpop.f32.mrb[0].mxu0
      %v1137 = vadd.f32 0.0, %v1136
      %1138 = vmatprep.mubr.bf16.mxu0 0
      %1139 = vmatmul.mubr.bf16.gmra.mrb[0].mxu0 %v1001
      %v1140 = vpop.f32.mrb[0].mxu0
      %v1141 = vadd.f32 0.0, %v1140
      %v1142 = vpop.f32.mrb[0].mxu0
      %v1143 = vadd.f32 0.0, %v1142
      %v1144 = vpop.f32.mrb[0].mxu0
      %v1145 = vadd.f32 0.0, %v1144
      %v1146 = vpop.f32.mrb[0].mxu0
      %v1147 = vadd.f32 0.0, %v1146
      %1148 = vmatprep.mubr.bf16.mxu0 0
      %1149 = vmatmul.mubr.bf16.gmra.mrb[0].mxu0 %v1002
      %v1150 = vpop.f32.mrb[0].mxu0
      %v1151 = vadd.f32 0.0, %v1150
      %v1152 = vpop.f32.mrb[0].mxu0
      %v1153 = vadd.f32 0.0, %v1152
      %v1154 = vpop.f32.mrb[0].mxu0
      %v1155 = vadd.f32 0.0, %v1154
      %v1156 = vpop.f32.mrb[0].mxu0
      %v1157 = vadd.f32 0.0, %v1156
      %1158 = vmatprep.mubr.bf16.mxu0 0
      %1159 = vmatmul.mubr.bf16.gmra.mrb[0].mxu0 %v1003
      %v1160 = vpop.f32.mrb[0].mxu0
      %v1161 = vadd.f32 0.0, %v1160
      %v1162 = vpop.f32.mrb[0].mxu0
      %v1163 = vadd.f32 0.0, %v1162
      %v1164 = vpop.f32.mrb[0].mxu0
      %v1165 = vadd.f32 0.0, %v1164
      %v1166 = vpop.f32.mrb[0].mxu0
      %v1167 = vadd.f32 0.0, %v1166
      %1168 = vmatprep.mubr.bf16.mxu0 0
      %1169 = vmatmul.mubr.bf16.gmra.mrb[0].mxu0 %v1004
      %v1170 = vpop.f32.mrb[0].mxu0
      %v1171 = vadd.f32 0.0, %v1170
      %v1172 = vpop.f32.mrb[0].mxu0
      %v1173 = vadd.f32 0.0, %v1172
      %v1174 = vpop.f32.mrb[0].mxu0
      %v1175 = vadd.f32 0.0, %v1174
      %v1176 = vpop.f32.mrb[0].mxu0
      %v1177 = vadd.f32 0.0, %v1176
      %1178 = vmatprep.mubr.bf16.mxu0 0
      %1179 = vmatmul.mubr.bf16.gmra.mrb[0].mxu0 %v1005
      %v1180 = vpop.f32.mrb[0].mxu0
      %v1181 = vadd.f32 0.0, %v1180
      %v1182 = vpop.f32.mrb[0].mxu0
      %v1183 = vadd.f32 0.0, %v1182
      %v1184 = vpop.f32.mrb[0].mxu0
      %v1185 = vadd.f32 0.0, %v1184
      %v1186 = vpop.f32.mrb[0].mxu0
      %v1187 = vadd.f32 0.0, %v1186
      %1188 = vmatprep.mubr.bf16.mxu0 0
      %1189 = vmatmul.mubr.bf16.gmra.mrb[0].mxu0 %v1006
      %v1190 = vpop.f32.mrb[0].mxu0
      %v1191 = vadd.f32 0.0, %v1190
      %v1192 = vpop.f32.mrb[0].mxu0
      %v1193 = vadd.f32 0.0, %v1192
      %v1194 = vpop.f32.mrb[0].mxu0
      %v1195 = vadd.f32 0.0, %v1194
      %v1196 = vpop.f32.mrb[0].mxu0
      %v1197 = vadd.f32 0.0, %v1196
      %1198 = vmatprep.mubr.bf16.mxu0 0
      %1199 = vmatmul.mubr.bf16.gmra.mrb[0].mxu0 %v1007
      %v1200 = vpop.f32.mrb[0].mxu0
      %v1201 = vadd.f32 0.0, %v1200
      %v1202 = vpop.f32.mrb[0].mxu0
      %v1203 = vadd.f32 0.0, %v1202
      %v1204 = vpop.f32.mrb[0].mxu0
      %v1205 = vadd.f32 0.0, %v1204
      %v1206 = vpop.f32.mrb[0].mxu0
      %v1207 = vadd.f32 0.0, %v1206
      %1208 = vdwg.mxu0
      %v1209 = vadd.f32 %v822, %v1131
      %v1210 = vadd.f32 %v824, %v1133
      %v1211 = vadd.f32 %v826, %v1135
      %v1212 = vadd.f32 %v828, %v1137
      %v1213 = vadd.f32 %v832, %v1141
      %v1214 = vadd.f32 %v834, %v1143
      %v1215 = vadd.f32 %v836, %v1145
      %v1216 = vadd.f32 %v838, %v1147
      %v1217 = vadd.f32 %v842, %v1151
      %v1218 = vadd.f32 %v844, %v1153
      %v1219 = vadd.f32 %v846, %v1155
      %v1220 = vadd.f32 %v848, %v1157
      %v1221 = vadd.f32 %v852, %v1161
      %v1222 = vadd.f32 %v854, %v1163
      %v1223 = vadd.f32 %v856, %v1165
      %v1224 = vadd.f32 %v858, %v1167
      %v1225 = vadd.f32 %v862, %v1171
      %v1226 = vadd.f32 %v864, %v1173
      %v1227 = vadd.f32 %v866, %v1175
      %v1228 = vadd.f32 %v868, %v1177
      %v1229 = vadd.f32 %v872, %v1181
      %v1230 = vadd.f32 %v874, %v1183
      %v1231 = vadd.f32 %v876, %v1185
      %v1232 = vadd.f32 %v878, %v1187
      %v1233 = vadd.f32 %v882, %v1191
      %v1234 = vadd.f32 %v884, %v1193
      %v1235 = vadd.f32 %v886, %v1195
      %v1236 = vadd.f32 %v888, %v1197
      %v1237 = vadd.f32 %v892, %v1201
      %v1238 = vadd.f32 %v894, %v1203
      %v1239 = vadd.f32 %v896, %v1205
      %v1240 = vadd.f32 %v898, %v1207
      %v1241 = vxor.u32 %v1210, 2147483648
      %v1242 = vxor.u32 %v1212, 2147483648
      %v1243 = vxor.u32 %v1214, 2147483648
      %v1244 = vxor.u32 %v1216, 2147483648
      %v1245 = vxor.u32 %v1218, 2147483648
      %v1246 = vxor.u32 %v1220, 2147483648
      %v1247 = vxor.u32 %v1222, 2147483648
      %v1248 = vxor.u32 %v1224, 2147483648
      %v1249 = vxor.u32 %v1226, 2147483648
      %v1250 = vxor.u32 %v1228, 2147483648
      %v1251 = vxor.u32 %v1230, 2147483648
      %v1252 = vxor.u32 %v1232, 2147483648
      %v1253 = vxor.u32 %v1234, 2147483648
      %v1254 = vxor.u32 %v1236, 2147483648
      %v1255 = vxor.u32 %v1238, 2147483648
      %v1256 = vxor.u32 %v1240, 2147483648
      %v1257 = vmul.f32 %v1241, 1.442695
      %v1258 = vpow.pop %v1257
      %v1259 = vmul.f32 %v1242, 1.442695
      %v1260 = vpow.pop %v1259
      %v1261 = vmul.f32 %v1243, 1.442695
      %v1262 = vpow.pop %v1261
      %v1263 = vmul.f32 %v1244, 1.442695
      %v1264 = vpow.pop %v1263
      %v1265 = vmul.f32 %v1245, 1.442695
      %v1266 = vpow.pop %v1265
      %v1267 = vmul.f32 %v1246, 1.442695
      %v1268 = vpow.pop %v1267
      %v1269 = vmul.f32 %v1247, 1.442695
      %v1270 = vpow.pop %v1269
      %v1271 = vmul.f32 %v1248, 1.442695
      %v1272 = vpow.pop %v1271
      %v1273 = vmul.f32 %v1249, 1.442695
      %v1274 = vpow.pop %v1273
      %v1275 = vmul.f32 %v1250, 1.442695
      %v1276 = vpow.pop %v1275
      %v1277 = vmul.f32 %v1251, 1.442695
      %v1278 = vpow.pop %v1277
      %v1279 = vmul.f32 %v1252, 1.442695
      %v1280 = vpow.pop %v1279
      %v1281 = vmul.f32 %v1253, 1.442695
      %v1282 = vpow.pop %v1281
      %v1283 = vmul.f32 %v1254, 1.442695
      %v1284 = vpow.pop %v1283
      %v1285 = vmul.f32 %v1255, 1.442695
      %v1286 = vpow.pop %v1285
      %v1287 = vmul.f32 %v1256, 1.442695
      %v1288 = vpow.pop %v1287
      %v1289 = vadd.f32 %v1258, 1.0
      %v1290 = vadd.f32 %v1260, 1.0
      %v1291 = vadd.f32 %v1262, 1.0
      %v1292 = vadd.f32 %v1264, 1.0
      %v1293 = vadd.f32 %v1266, 1.0
      %v1294 = vadd.f32 %v1268, 1.0
      %v1295 = vadd.f32 %v1270, 1.0
      %v1296 = vadd.f32 %v1272, 1.0
      %v1297 = vadd.f32 %v1274, 1.0
      %v1298 = vadd.f32 %v1276, 1.0
      %v1299 = vadd.f32 %v1278, 1.0
      %v1300 = vadd.f32 %v1280, 1.0
      %v1301 = vadd.f32 %v1282, 1.0
      %v1302 = vadd.f32 %v1284, 1.0
      %v1303 = vadd.f32 %v1286, 1.0
      %v1304 = vadd.f32 %v1288, 1.0
      %v1305 = vrcp.pop %v1289
      %v1306 = vmul.f32 1.0, %v1305
      %v1307 = vrcp.pop %v1290
      %v1308 = vmul.f32 1.0, %v1307
      %v1309 = vrcp.pop %v1291
      %v1310 = vmul.f32 1.0, %v1309
      %v1311 = vrcp.pop %v1292
      %v1312 = vmul.f32 1.0, %v1311
      %v1313 = vrcp.pop %v1293
      %v1314 = vmul.f32 1.0, %v1313
      %v1315 = vrcp.pop %v1294
      %v1316 = vmul.f32 1.0, %v1315
      %v1317 = vrcp.pop %v1295
      %v1318 = vmul.f32 1.0, %v1317
      %v1319 = vrcp.pop %v1296
      %v1320 = vmul.f32 1.0, %v1319
      %v1321 = vrcp.pop %v1297
      %v1322 = vmul.f32 1.0, %v1321
      %v1323 = vrcp.pop %v1298
      %v1324 = vmul.f32 1.0, %v1323
      %v1325 = vrcp.pop %v1299
      %v1326 = vmul.f32 1.0, %v1325
      %v1327 = vrcp.pop %v1300
      %v1328 = vmul.f32 1.0, %v1327
      %v1329 = vrcp.pop %v1301
      %v1330 = vmul.f32 1.0, %v1329
      %v1331 = vrcp.pop %v1302
      %v1332 = vmul.f32 1.0, %v1331
      %v1333 = vrcp.pop %v1303
      %v1334 = vmul.f32 1.0, %v1333
      %v1335 = vrcp.pop %v1304
      %v1336 = vmul.f32 1.0, %v1335
      %v1337 = vmul.f32 %v1209, %v1306
      %v1338 = vmul.f32 %v1211, %v1308
      %v1339 = vmul.f32 %v1213, %v1310
      %v1340 = vmul.f32 %v1215, %v1312
      %v1341 = vmul.f32 %v1217, %v1314
      %v1342 = vmul.f32 %v1219, %v1316
      %v1343 = vmul.f32 %v1221, %v1318
      %v1344 = vmul.f32 %v1223, %v1320
      %v1345 = vmul.f32 %v1225, %v1322
      %v1346 = vmul.f32 %v1227, %v1324
      %v1347 = vmul.f32 %v1229, %v1326
      %v1348 = vmul.f32 %v1231, %v1328
      %v1349 = vmul.f32 %v1233, %v1330
      %v1350 = vmul.f32 %v1235, %v1332
      %v1351 = vmul.f32 %v1237, %v1334
      %v1352 = vmul.f32 %v1239, %v1336
      %v1353 = vmax.f32 %v1337, %v1338
      %v1354 = vmax.f32 %v1353, %v1339
      %v1355 = vmax.f32 %v1354, %v1340
      %v1356 = vrot.slane %v1355, 4
      %v1357 = vmax.f32 %v1355, %v1356
      %v1358 = vrot.slane %v1357, 2
      %v1359 = vmax.f32 %v1357, %v1358
      %v1360 = vrot.slane %v1359, 1
      %v1361 = vmax.f32 %v1359, %v1360
      %v1362 = vmax.f32 %v1341, %v1342
      %v1363 = vmax.f32 %v1362, %v1343
      %v1364 = vmax.f32 %v1363, %v1344
      %v1365 = vrot.slane %v1364, 4
      %v1366 = vmax.f32 %v1364, %v1365
      %v1367 = vrot.slane %v1366, 2
      %v1368 = vmax.f32 %v1366, %v1367
      %v1369 = vrot.slane %v1368, 1
      %v1370 = vmax.f32 %v1368, %v1369
      %v1371 = vmax.f32 %v1345, %v1346
      %v1372 = vmax.f32 %v1371, %v1347
      %v1373 = vmax.f32 %v1372, %v1348
      %v1374 = vrot.slane %v1373, 4
      %v1375 = vmax.f32 %v1373, %v1374
      %v1376 = vrot.slane %v1375, 2
      %v1377 = vmax.f32 %v1375, %v1376
      %v1378 = vrot.slane %v1377, 1
      %v1379 = vmax.f32 %v1377, %v1378
      %v1380 = vmax.f32 %v1349, %v1350
      %v1381 = vmax.f32 %v1380, %v1351
      %v1382 = vmax.f32 %v1381, %v1352
      %v1383 = vrot.slane %v1382, 4
      %v1384 = vmax.f32 %v1382, %v1383
      %v1385 = vrot.slane %v1384, 2
      %v1386 = vmax.f32 %v1384, %v1385
      %v1387 = vrot.slane %v1386, 1
      %v1388 = vmax.f32 %v1386, %v1387
      %v1389 = vpack.c.bf16 %v1361, %v1361
      %v1390 = vpack.c.bf16 %v1370, %v1370
      %v1391 = vpack.c.bf16 %v1379, %v1379
      %v1392 = vpack.c.bf16 %v1388, %v1388
      %v1393 = vld [vmem:[%s2] sm:$0xf]
      %v1394 = vld [vmem:[%s2 + $0x4] sm:$0xf]
      %v1395 = vld [vmem:[%s2 + $0x8] sm:$0xf]
      %v1396 = vld [vmem:[%s2 + $0xc] sm:$0xf]
      %v1397 = vld [vmem:[%s2 + $0x10] sm:$0xf]
      %v1398 = vld [vmem:[%s2 + $0x14] sm:$0xf]
      %v1399 = vld [vmem:[%s2 + $0x18] sm:$0xf]
      %v1400 = vld [vmem:[%s2 + $0x1c] sm:$0xf]
      %v1401 = vld [vmem:[%s2 + $0x20] sm:$0xf]
      %v1402 = vld [vmem:[%s2 + $0x24] sm:$0xf]
      %v1403 = vld [vmem:[%s2 + $0x28] sm:$0xf]
      %v1404 = vld [vmem:[%s2 + $0x2c] sm:$0xf]
      %v1405 = vld [vmem:[%s2 + $0x30] sm:$0xf]
      %v1406 = vld [vmem:[%s2 + $0x34] sm:$0xf]
      %v1407 = vld [vmem:[%s2 + $0x38] sm:$0xf]
      %v1408 = vld [vmem:[%s2 + $0x3c] sm:$0xf]
      %v1409 = vld [vmem:[%s3] sm:$0x1]
      %v1411 = vlaneseq
      %v1412 = vshrl.u32 %v1411, 7
      %v1413 = vsub.s32 0, %v1412
      %v1414 = vrot.slane %v1409, %v1413
      %v1420 = vunpack.c.l.b16 %v1389
      %v1421 = vunpack.c.l.b16 %v1390
      %v1422 = vunpack.c.l.b16 %v1391
      %v1423 = vunpack.c.l.b16 %v1392
      %vm1424 = vcmask 1041409
      %v1425 = vsel %vm1424, %v1421, %v1420
      %vm1426 = vcmask 1042434
      %v1427 = vsel %vm1426, %v1422, %v1425
      %vm1428 = vcmask 1043459
      %v1429 = vsel %vm1428, %v1423, %v1427
      %v1430 = vpack.c.b16 %v1429, %v1429
      %v1448 = vunpack.c.l.b16 %v1393
      %v1449 = vunpack.c.l.b16 %v1394
      %v1450 = vunpack.c.l.b16 %v1395
      %v1451 = vunpack.c.l.b16 %v1396
      %v1452 = vunpack.c.l.b16 %v1397
      %v1453 = vunpack.c.l.b16 %v1398
      %v1454 = vunpack.c.l.b16 %v1399
      %v1455 = vunpack.c.l.b16 %v1400
      %v1456 = vunpack.c.l.b16 %v1401
      %v1457 = vunpack.c.l.b16 %v1402
      %v1458 = vunpack.c.l.b16 %v1403
      %v1459 = vunpack.c.l.b16 %v1404
      %v1460 = vunpack.c.l.b16 %v1405
      %v1461 = vunpack.c.l.b16 %v1406
      %v1462 = vunpack.c.l.b16 %v1407
      %v1463 = vunpack.c.l.b16 %v1408
      %v1464 = vpack.c.b16 %v1449, %v1448
      %v1465 = vpack.c.b16 %v1451, %v1450
      %v1466 = vpack.c.b16 %v1453, %v1452
      %v1467 = vpack.c.b16 %v1455, %v1454
      %v1468 = vpack.c.b16 %v1457, %v1456
      %v1469 = vpack.c.b16 %v1459, %v1458
      %v1470 = vpack.c.b16 %v1461, %v1460
      %v1471 = vpack.c.b16 %v1463, %v1462
      %1480 = vmatprep.subr.bf16.mxu0 0
      %1481 = vmatpush1.bf16.msra.mxu0 %v1464
      %1482 = vmatprep.subr.bf16.mxu0 0
      %1483 = vmatpush1.bf16.msra.mxu0 %v1465
      %1484 = vmatprep.subr.bf16.mxu0 0
      %1485 = vmatpush1.bf16.msra.mxu0 %v1466
      %1486 = vmatprep.subr.bf16.mxu0 0
      %1487 = vmatpush1.bf16.msra.mxu0 %v1467
      %1488 = vmatprep.subr.bf16.mxu0 0
      %1489 = vmatpush1.bf16.msra.mxu0 %v1468
      %1490 = vmatprep.subr.bf16.mxu0 0
      %1491 = vmatpush1.bf16.msra.mxu0 %v1469
      %1492 = vmatprep.subr.bf16.mxu0 0
      %1493 = vmatpush1.bf16.msra.mxu0 %v1470
      %1494 = vmatprep.subr.bf16.mxu0 0
      %1495 = vmatpush1.bf16.msra.mxu0 %v1471
      %1496 = vmatprep.subr.bf16.mxu0 0
      %1497 = vmatpush1.bf16.msra.mxu0 0
      %1498 = vmatprep.subr.bf16.mxu0 0
      %1499 = vmatpush1.bf16.msra.mxu0 0
      %1500 = vmatprep.subr.bf16.mxu0 0
      %1501 = vmatpush1.bf16.msra.mxu0 0
      %1502 = vmatprep.subr.bf16.mxu0 0
      %1503 = vmatpush1.bf16.msra.mxu0 0
      %1504 = vmatprep.subr.bf16.mxu0 0
      %1505 = vmatpush1.bf16.msra.mxu0 0
      %1506 = vmatprep.subr.bf16.mxu0 0
      %1507 = vmatpush1.bf16.msra.mxu0 0
      %1508 = vmatprep.subr.bf16.mxu0 0
      %1509 = vmatpush1.bf16.msra.mxu0 0
      %1510 = vmatprep.subr.bf16.mxu0 0
      %1511 = vmatpush1.bf16.msra.mxu0 0
      %1512 = vmatprep.mubr.bf16.mxu0 0
      %1513 = vmatmul.mubr.bf16.gmra.mrb[0].mxu0 %v1430
      %v1514 = vpop.f32.mrb[0].mxu0
      %v1515 = vadd.f32 %v1414, %v1514
      %v1516 = vpop.f32.mrb[0].mxu0
      %v1517 = vpop.f32.mrb[0].mxu0
      %v1518 = vpop.f32.mrb[0].mxu0
      %1519 = vdwg.mxu0
      %1520 = vst [vmem:[%s200] sm:$0xf] %v1515
      %p1521 = scmp.lt.s32.totalorder %s15, 3
      %s1522 = scalar_select %p1521, %s15, 3
      %s1523 = smul.addr %s1522, 4
      %s1524 = scalar_lea.vmem %s4, %s1523
      // Predicated region
      $region37: #{torch_model_forward.1} parent=35 // pred_check
        %p1525 = pneg %p122
      $region38: #{torch_model_forward.1} parent=35 // pred_check_branch
        %1527 = sbr.rel (%p1525) target = $region40
      $region39: #{torch_model_forward.1} parent=35 // pred_region
        _
      $region40: #{torch_model_forward.1} parent=35 // pred_fallthru
        _
    $region36: #{torch_model_forward.1} parent=5 // pred_fallthru
      _
    %p1528 = scmp.le.s32.totalorder 2, %s10
    // Predicated region
    $region41: #{torch_model_forward.1} parent=5 // pred_check
      %p1529 = pneg %p1528
    $region42: #{torch_model_forward.1} parent=5 // pred_check_branch
      %1531 = sbr.rel (%p1529) target = $region44
    $region43: #{torch_model_forward.1} parent=5 // pred_region
      %s1532 = ssub.s32 %s10, 2
      // Predicated region
      $region45: #{torch_model_forward.1} parent=43 // pred_check
        %p1533 = pneg %p128
      $region46: #{torch_model_forward.1} parent=43 // pred_check_branch
        %1535 = sbr.rel (%p1533) target = $region48
      $region47: #{torch_model_forward.1} parent=43 // pred_region
        %p1536 = scmp.lt.s32.totalorder %s16, 3
        %s1537 = scalar_select %p1536, %s16, 3
        %s1538 = smul.addr %s1537, 4
        %s1539 = scalar_lea.vmem %s4, %s1538
      $region48: #{torch_model_forward.1} parent=43 // pred_fallthru
        _
    $region44: #{torch_model_forward.1} parent=5 // pred_fallthru
      _
  $region6: #{torch_model_forward.1} parent=0 // loop_footer
    %s14 = sadd.s32 1, %s10
  $region7: #{torch_model_forward.1} parent=0 // loop_footer_branch
    %9 = sbr.rel target = $region3
  $region8: #{torch_model_forward.1} parent=0 // loop_exit
    _

</llo_original>
